<compile_context>
chip_gen: v5e
topology: v5e:2x2
jax: 0.10.0
libtpu: 0.0.40
codegen_flags: <defaults>
</compile_context>

<pallas_src>
import math

import jax
import jax.numpy as jnp
from jax.experimental import pallas as pl
from jax.experimental.pallas import tpu as pltpu

_LANE = 128
_MAX_BLOCK_ROWS = 512                # keeps block <= 2 MiB for any lane width
_LANE_WIDTHS = (1024, 512, 256, 128)  # prefer 512-1024 wide lane-dense tiles


def _copy_kernel(x_ref, o_ref):
    # Pure element copy of the current (block_rows, lane) tile.
    o_ref[...] = x_ref[...]


def _squeeze_impl(x):
    squeezed_shape = tuple(d for d in x.shape if d != 1)
    total = math.prod(squeezed_shape) if squeezed_shape else 1

    # Squeeze is pure metadata.  If the flat size cannot be laid out
    # lane-dense, the kernel adds nothing but a full HBM round trip, so take
    # the free reshape path instead.
    if total == 0 or total % _LANE != 0:
        return x.reshape(squeezed_shape)

    # Largest lane width (multiple of 128, <= 1024) that divides the total.
    lane = next(l for l in _LANE_WIDTHS if total % l == 0)
    rows = total // lane

    # block_rows is either the full row extent or a multiple of 8 (512),
    # satisfying the (8, 128) block constraint; 512x1024 f32 = 2 MiB/block.
    block_rows = min(rows, _MAX_BLOCK_ROWS)
    grid = (pl.cdiv(rows, block_rows),)

    x2 = x.reshape(rows, lane)
    out2 = pl.pallas_call(
        _copy_kernel,
        out_shape=jax.ShapeDtypeStruct((rows, lane), x.dtype),
        grid=grid,
        in_specs=[pl.BlockSpec((block_rows, lane), lambda i: (i, 0))],
        out_specs=pl.BlockSpec((block_rows, lane), lambda i: (i, 0)),
        input_output_aliases={0: 0},  # reuse the input HBM buffer (donated)
        compiler_params=pltpu.CompilerParams(
            dimension_semantics=("parallel",),      # megacore sharding on v7x
            vmem_limit_bytes=32 * 1024 * 1024,      # explicit budget, all gens
        ),
    )(x2)
    return out2.reshape(squeezed_shape)


# Donate the input so input_output_aliases actually elides the extra HBM
# allocation (callers that still need x should not donate / not reuse it).
nn_squeeze = jax.jit(_squeeze_impl, donate_argnums=0)


if __name__ == "__main__":
    key = jax.random.PRNGKey(0)
    # NCHW input with a squeezable channel dim: [2, 1, 16, 16] -> [2, 16, 16]
    x = jax.random.normal(key, (2, 1, 16, 16), dtype=jnp.float32)

    # Reference computed BEFORE calling nn_squeeze (x's buffer is donated).
    ref = jax.block_until_ready(jnp.squeeze(x))

    y = nn_squeeze(x)
    y = jax.block_until_ready(y)

    assert y.shape == ref.shape, (y.shape, ref.shape)
    assert y.dtype == ref.dtype
    assert bool(jnp.allclose(y, ref))

    print("KERNEL_OK")
</pallas_src>

<mosaic_0001>
module attributes {stable_mosaic.version = 11 : i64} {
  func.func @_copy_kernel(%arg0: i32, %arg1: memref<1x512xf32, #tpu.memory_space<vmem>>, %arg2: memref<1x512xf32, #tpu.memory_space<vmem>>) attributes {dimension_semantics = [#tpu.dimension_semantics<parallel>], iteration_bounds = array<i64: 1>, scalar_prefetch = 0 : i64, scratch_operands = 0 : i64, tpu.core_type = #tpu.core_type<tc>, window_params = [{transform_indices = @transform_0, window_bounds = array<i64: 1, 512>}, {transform_indices = @transform_1, window_bounds = array<i64: 1, 512>}]} {
    %c0 = arith.constant 0 : index
    %c0_0 = arith.constant 0 : index
    %0 = vector.load %arg1[%c0, %c0_0] : memref<1x512xf32, #tpu.memory_space<vmem>>, vector<1x512xf32>
    %c0_1 = arith.constant 0 : index
    %c0_2 = arith.constant 0 : index
    %1 = vector.load %arg2[%c0_1, %c0_2] : memref<1x512xf32, #tpu.memory_space<vmem>>, vector<1x512xf32>
    tpu.vector_store %arg2[%c0_1, %c0_2], %0 {strides = array<i32>} : memref<1x512xf32, #tpu.memory_space<vmem>>, vector<1x512xf32>,
    return
  }
  func.func @transform_0(%arg0: i32) -> (i32, i32) {
    %c0_i32 = arith.constant 0 : i32
    %c0_i32_0 = arith.constant 0 : i32
    return %arg0, %c0_i32 : i32, i32
  }
  func.func @transform_1(%arg0: i32) -> (i32, i32) {
    %c0_i32 = arith.constant 0 : i32
    %c0_i32_0 = arith.constant 0 : i32
    return %arg0, %c0_i32 : i32, i32
  }
}

</mosaic_0001>

<llo_original>
// kernel: _squeeze_impl.1
$region0: #{_squeeze_impl.1}
  #allocation0 [shape = 'u32[]', space=smem, size = 0x4, offset = 0x4, fixed_abs, tag = 'smem constant byte address 0x4 - core index']
  #allocation1 [shape = 'u32[72,128]{1,0:T(1,128)}', space=vmem, size = 0x9000, scoped, tag = 'internal scratch']
  %s0 = inlined_call_operand.vmem [shape: f32[1,512], index: 0, kind: input, shape index: {}, may-alias: {0,1}]
  %s1 = inlined_call_operand.vmem [shape: f32[1,512], index: 1, kind: output, shape index: {}, may-alias: {0,1}]
  %s2 = sld [smem:[#allocation0]]
  $region14: #{_squeeze_impl.1} parent=0
    _
  %s4 = ssub.s32 1, %s2
  %s5 = scalar_select 0, %s4, %s2
  // Predicated region
  $region2: #{_squeeze_impl.1} parent=0 // pred_check
    _
  $region3: #{_squeeze_impl.1} parent=0 // pred_check_branch
    %7 = sbr.rel (0) target = $region5
  $region4: #{_squeeze_impl.1} parent=0 // pred_region
    _
  $region5: #{_squeeze_impl.1} parent=0 // pred_fallthru
    _
  %v8 = vld [vmem:[%s0] sm:$0xf]
  %v9 = vlaneseq
  %vm10 = vcmp.ge.s32.totalorder %v9, 0
  %vm11 = vcmp.lt.s32.totalorder %v9, 512
  %vm12 = vmand %vm10, %vm11
  %13 = vst.msk [vmem:[%s1] sm:$0xf] %vm12, %v8
  // Predicated region
  $region6: #{_squeeze_impl.1} parent=0 // pred_check
    _
  $region7: #{_squeeze_impl.1} parent=0 // pred_check_branch
    %15 = sbr.rel (0) target = $region9
  $region8: #{_squeeze_impl.1} parent=0 // pred_region
    _
  $region9: #{_squeeze_impl.1} parent=0 // pred_fallthru
    _
  // Predicated region
  $region10: #{_squeeze_impl.1} parent=0 // pred_check
    _
  $region11: #{_squeeze_impl.1} parent=0 // pred_check_branch
    %17 = sbr.rel (0) target = $region13
  $region12: #{_squeeze_impl.1} parent=0 // pred_region
    _
  $region13: #{_squeeze_impl.1} parent=0 // pred_fallthru
    _

</llo_original>
